<compile_context>
chip_gen: v5e
topology: v5e:2x2
jax: 0.10.0
libtpu: 0.0.40
codegen_flags: <defaults>
</compile_context>

<pallas_src>
import numpy as np
import jax
import jax.numpy as jnp
from jax.experimental import pallas as pl
from jax.experimental.pallas import tpu as pltpu


C_PAD = 128  # lane-padded logit width (keeps the output store lane-dense)


def dbcnet_kernel(a_ref, x_ref, w1_ref, b1_ref, mask_ref, w2_ref, b2_ref,
                  out_ref):
    """Fused dual-branch forward + convex blend (one batch tile).

    a_ref   : SMEM (1,1) f32          -- mixing coefficient
    x_ref   : VMEM (TB, 2D) bf16      -- [sample1 | sample2] features
    w1_ref  : VMEM (2D, 2H) bf16      -- blockdiag(w1b, w1c)
    b1_ref  : VMEM (1, 2H)  f32       -- [b1b | b1c]
    mask_ref: VMEM (1, 2H)  f32       -- 1.0 on BLB hidden lanes, 0.0 on CLB
    w2_ref  : VMEM (2H, C_PAD) bf16   -- [w2b ; w2c] stacked on the K axis
    b2_ref  : VMEM (1, 2*C_PAD) f32   -- b2b in lanes [0,128), b2c in [128,256)
    out_ref : VMEM (TB, C_PAD) f32    -- blended (lane-padded) logits
    """
    a = a_ref[0, 0]

    # Layer 1: both branches in one block-diag matmul (single MXU pass).
    h = jnp.dot(x_ref[...], w1_ref[...], preferred_element_type=jnp.float32)
    h = jnp.maximum(h + b1_ref[...], 0.0)                  # f32 bias + ReLU

    # Fold the convex blend into layer 2 by pre-scaling the hidden halves:
    #   scale = a on BLB lanes, (1 - a) on CLB lanes  (one broadcasted FMA).
    scale = (1.0 - a) + mask_ref[...] * (2.0 * a - 1.0)    # (1, 2H)
    h = (h * scale).astype(jnp.bfloat16)

    # Layer 2: single (TB,2H)x(2H,128) matmul == a*blb + (1-a)*clb (sans bias).
    out = jnp.dot(h, w2_ref[...], preferred_element_type=jnp.float32)

    # Blended bias: b2c + a*(b2b - b2c).  Lane slices sit on a 128-lane
    # (vreg) boundary -> no cross-lane shuffles.
    bias_b = b2_ref[:, :C_PAD]
    bias_c = b2_ref[:, C_PAD:]
    out_ref[...] = out + (bias_c + a * (bias_b - bias_c))   # lane-dense store


def dbcnet_forward(a_scalar, x1, x2, packed, *, batch_tile=128):
    """Run the fused DBCNet forward. Returns (blended_logits[B, C], a)."""
    B, D = x1.shape
    C = packed["num_classes"]
    H2 = packed["w1"].shape[1]          # 2 * hidden

    # Per-call input packing (weights were packed once host-side).
    x = jnp.concatenate([x1, x2], axis=-1).astype(jnp.bfloat16)   # (B, 2D)
    a_arr = jnp.asarray(a_scalar, dtype=jnp.float32).reshape(1, 1)

    TB = min(batch_tile, B)
    assert B % TB == 0, "batch must be a multiple of the batch tile"
    grid = (B // TB,)

    flops = 2 * B * (2 * D) * H2 + 2 * B * H2 * C_PAD
    bytes_accessed = (x.size * 2
                      + packed["w1"].size * 2 + packed["b1"].size * 4
                      + packed["mask"].size * 4
                      + packed["w2"].size * 2 + packed["b2"].size * 4
                      + 4 + B * C_PAD * 4)

    out_padded = pl.pallas_call(
        dbcnet_kernel,
        out_shape=jax.ShapeDtypeStruct((B, C_PAD), jnp.float32),
        grid=grid,
        in_specs=[
            pl.BlockSpec(memory_space=pltpu.MemorySpace.SMEM),   # a (scalar)
            pl.BlockSpec((TB, 2 * D), lambda i: (i, 0)),         # x: batch-tiled
            pl.BlockSpec((2 * D, H2), lambda i: (0, 0)),         # w1: VMEM-resident
            pl.BlockSpec((1, H2), lambda i: (0, 0)),             # b1
            pl.BlockSpec((1, H2), lambda i: (0, 0)),             # branch mask
            pl.BlockSpec((H2, C_PAD), lambda i: (0, 0)),         # w2: VMEM-resident
            pl.BlockSpec((1, 2 * C_PAD), lambda i: (0, 0)),      # b2
        ],
        out_specs=pl.BlockSpec((TB, C_PAD), lambda i: (i, 0)),   # lane-dense store
        compiler_params=pltpu.CompilerParams(
            dimension_semantics=("parallel",)),                  # megacore on v7x
        cost_estimate=pl.CostEstimate(flops=flops, transcendentals=0,
                                      bytes_accessed=bytes_accessed),
    )(a_arr, x, packed["w1"], packed["b1"], packed["mask"],
      packed["w2"], packed["b2"])

    return out_padded[:, :C], a_scalar


def init_params(key, in_dim, hidden, num_classes):
    """Per-branch weights, [in, out] layout (transpose of nn.Linear)."""
    ks = jax.random.split(key, 8)
    s1 = 1.0 / np.sqrt(in_dim)
    s2 = 1.0 / np.sqrt(hidden)
    return {
        # BLB branch (frozen in torch; forward math identical)
        "w1b": jax.random.uniform(ks[0], (in_dim, hidden), jnp.float32, -s1, s1),
        "b1b": jax.random.uniform(ks[1], (1, hidden), jnp.float32, -s1, s1),
        "w2b": jax.random.uniform(ks[2], (hidden, num_classes), jnp.float32, -s2, s2),
        "b2b": jax.random.uniform(ks[3], (1, num_classes), jnp.float32, -s2, s2),
        # CLB branch
        "w1c": jax.random.uniform(ks[4], (in_dim, hidden), jnp.float32, -s1, s1),
        "b1c": jax.random.uniform(ks[5], (1, hidden), jnp.float32, -s1, s1),
        "w2c": jax.random.uniform(ks[6], (hidden, num_classes), jnp.float32, -s2, s2),
        "b2c": jax.random.uniform(ks[7], (1, num_classes), jnp.float32, -s2, s2),
    }


def pack_params(p):
    """One-time host-side packing: block-diag W1, stacked W2, bf16 casts."""
    D, H = p["w1b"].shape
    C = p["w2b"].shape[1]
    assert C <= C_PAD

    # Layer 1: block-diagonal so [x1|x2] @ w1 = [h_blb | h_clb].
    w1 = jnp.zeros((2 * D, 2 * H), jnp.float32)
    w1 = w1.at[:D, :H].set(p["w1b"]).at[D:, H:].set(p["w1c"])
    b1 = jnp.concatenate([p["b1b"], p["b1c"]], axis=-1)                 # (1, 2H)

    # Branch mask over hidden lanes: 1 for BLB half, 0 for CLB half.
    mask = jnp.concatenate([jnp.ones((1, H), jnp.float32),
                            jnp.zeros((1, H), jnp.float32)], axis=-1)   # (1, 2H)

    # Layer 2: stacked on K so [a*h_blb | (1-a)*h_clb] @ w2 = blended logits.
    w2 = jnp.zeros((2 * H, C_PAD), jnp.float32)
    w2 = w2.at[:H, :C].set(p["w2b"]).at[H:, :C].set(p["w2c"])
    b2 = jnp.zeros((1, 2 * C_PAD), jnp.float32)
    b2 = b2.at[:, :C].set(p["b2b"]).at[:, C_PAD:C_PAD + C].set(p["b2c"])

    return {"w1": w1.astype(jnp.bfloat16), "b1": b1, "mask": mask,
            "w2": w2.astype(jnp.bfloat16), "b2": b2,
            "num_classes": C}


def sample_mixing_coeff(mode, beta_mode, betas, rng):
    """Mirrors the torch module's `a` selection (host-side, not a kernel op)."""
    if mode == "train":
        if beta_mode == "fixed":
            return float(rng.choice(np.asarray(betas, dtype=np.float32), 1)[0])
        return float(rng.beta(5.0, 2.0))     # Beta(5, 2) sample
    return 0.8                               # eval mode


def reference_forward(a, x1, x2, p):
    """Pure-JAX reference with module semantics (blend after branch logits)."""
    x1b = x1.astype(jnp.bfloat16)
    x2b = x2.astype(jnp.bfloat16)
    hb = jnp.maximum(jnp.dot(x1b, p["w1b"].astype(jnp.bfloat16),
                             preferred_element_type=jnp.float32) + p["b1b"], 0.0)
    blb = jnp.dot(hb.astype(jnp.bfloat16), p["w2b"].astype(jnp.bfloat16),
                  preferred_element_type=jnp.float32) + p["b2b"]
    hc = jnp.maximum(jnp.dot(x2b, p["w1c"].astype(jnp.bfloat16),
                             preferred_element_type=jnp.float32) + p["b1c"], 0.0)
    clb = jnp.dot(hc.astype(jnp.bfloat16), p["w2c"].astype(jnp.bfloat16),
                  preferred_element_type=jnp.float32) + p["b2c"]
    return a * blb + (1.0 - a) * clb


if __name__ == "__main__":
    # Small deterministic config: 'AU'-style branch (12 AU logits).
    B, D, H, C = 256, 32, 32, 12

    key = jax.random.PRNGKey(0)
    k_p, k_x1, k_x2 = jax.random.split(key, 3)

    raw_params = init_params(k_p, D, H, C)
    packed = pack_params(raw_params)
    sample1 = jax.random.normal(k_x1, (B, D), jnp.float32)
    sample2 = jax.random.normal(k_x2, (B, D), jnp.float32)

    # --- train mode with fixed-beta choice (deterministic host RNG) ---
    rng = np.random.default_rng(0)
    a_train = sample_mixing_coeff("train", "fixed", betas=[0.5, 0.6, 0.7, 0.8], rng=rng)
    out_train, a_used_train = dbcnet_forward(a_train, sample1, sample2, packed)
    out_train = jax.block_until_ready(out_train)

    # --- eval mode: a = 0.8 ---
    a_eval = sample_mixing_coeff("eval", "fixed", betas=None, rng=rng)
    out_eval, a_used_eval = dbcnet_forward(a_eval, sample1, sample2, packed)
    out_eval = jax.block_until_ready(out_eval)

    # correctness check against pure-JAX reference (bf16 matmul numerics; the
    # kernel folds the blend into layer 2, so tolerances cover bf16 rounding).
    ref_train = reference_forward(a_train, sample1, sample2, raw_params)
    ref_eval = reference_forward(a_eval, sample1, sample2, raw_params)
    np.testing.assert_allclose(np.asarray(out_train), np.asarray(ref_train),
                               rtol=2e-2, atol=2e-2)
    np.testing.assert_allclose(np.asarray(out_eval), np.asarray(ref_eval),
                               rtol=2e-2, atol=2e-2)
    assert out_train.shape == (B, C) and out_eval.shape == (B, C)

    print("KERNEL_OK")
</pallas_src>

<mosaic_0001>
module attributes {stable_mosaic.version = 11 : i64} {
  func.func @dbcnet_kernel(%arg0: i32, %arg1: memref<1x1xf32, #tpu.memory_space<smem>>, %arg2: memref<128x64xbf16, #tpu.memory_space<vmem>>, %arg3: memref<64x64xbf16, #tpu.memory_space<vmem>>, %arg4: memref<1x64xf32, #tpu.memory_space<vmem>>, %arg5: memref<1x64xf32, #tpu.memory_space<vmem>>, %arg6: memref<64x128xbf16, #tpu.memory_space<vmem>>, %arg7: memref<1x256xf32, #tpu.memory_space<vmem>>, %arg8: memref<128x128xf32, #tpu.memory_space<vmem>>) attributes {dimension_semantics = [#tpu.dimension_semantics<parallel>], iteration_bounds = array<i64: 2>, scalar_prefetch = 0 : i64, scratch_operands = 0 : i64, tpu.core_type = #tpu.core_type<tc>, window_params = [{transform_indices = @transform_0, window_bounds = array<i64: 1, 1>}, {transform_indices = @transform_1, window_bounds = array<i64: 128, 64>}, {pipeline_mode = #tpu.pipeline_mode<synchronous>, transform_indices = @transform_2, window_bounds = array<i64: 64, 64>}, {pipeline_mode = #tpu.pipeline_mode<synchronous>, transform_indices = @transform_3, window_bounds = array<i64: 1, 64>}, {pipeline_mode = #tpu.pipeline_mode<synchronous>, transform_indices = @transform_4, window_bounds = array<i64: 1, 64>}, {pipeline_mode = #tpu.pipeline_mode<synchronous>, transform_indices = @transform_5, window_bounds = array<i64: 64, 128>}, {pipeline_mode = #tpu.pipeline_mode<synchronous>, transform_indices = @transform_6, window_bounds = array<i64: 1, 256>}, {transform_indices = @transform_7, window_bounds = array<i64: 128, 128>}]} {
    %c0 = arith.constant 0 : index
    %c0_0 = arith.constant 0 : index
    %0 = memref.load %arg1[%c0, %c0_0] : memref<1x1xf32, #tpu.memory_space<smem>>
    %c0_1 = arith.constant 0 : index
    %c0_2 = arith.constant 0 : index
    %1 = vector.load %arg2[%c0_1, %c0_2] : memref<128x64xbf16, #tpu.memory_space<vmem>>, vector<128x64xbf16>
    %c0_3 = arith.constant 0 : index
    %c0_4 = arith.constant 0 : index
    %2 = vector.load %arg3[%c0_3, %c0_4] : memref<64x64xbf16, #tpu.memory_space<vmem>>, vector<64x64xbf16>
    %cst = arith.constant dense<0.000000e+00> : vector<128x64xf32>
    %3 = tpu.matmul %1, %2, %cst {dimension_numbers = #tpu.dot_dimension_numbers<[1], [0], [0], [1], [0, 0, 1, 1], [], []>} : vector<128x64xbf16>, vector<64x64xbf16>, vector<128x64xf32> -> vector<128x64xf32>
    %c0_5 = arith.constant 0 : index
    %c0_6 = arith.constant 0 : index
    %4 = vector.load %arg4[%c0_5, %c0_6] : memref<1x64xf32, #tpu.memory_space<vmem>>, vector<1x64xf32>
    %5 = vector.broadcast %4 : vector<1x64xf32> to vector<128x64xf32>
    %6 = arith.addf %3, %5 : vector<128x64xf32>
    %cst_7 = arith.constant 0.000000e+00 : f32
    %7 = vector.broadcast %cst_7 : f32 to vector<128x64xf32>
    %8 = arith.maximumf %6, %7 : vector<128x64xf32>
    %cst_8 = arith.constant 1.000000e+00 : f32
    %9 = arith.subf %cst_8, %0 : f32
    %c0_9 = arith.constant 0 : index
    %c0_10 = arith.constant 0 : index
    %10 = vector.load %arg5[%c0_9, %c0_10] : memref<1x64xf32, #tpu.memory_space<vmem>>, vector<1x64xf32>
    %cst_11 = arith.constant 2.000000e+00 : f32
    %11 = arith.mulf %cst_11, %0 : f32
    %cst_12 = arith.constant 1.000000e+00 : f32
    %12 = arith.subf %11, %cst_12 : f32
    %13 = vector.broadcast %12 : f32 to vector<1x64xf32>
    %14 = arith.mulf %10, %13 : vector<1x64xf32>
    %15 = vector.broadcast %9 : f32 to vector<1x64xf32>
    %16 = arith.addf %15, %14 : vector<1x64xf32>
    %17 = vector.broadcast %16 : vector<1x64xf32> to vector<128x64xf32>
    %18 = arith.mulf %8, %17 : vector<128x64xf32>
    %19 = arith.truncf %18 : vector<128x64xf32> to vector<128x64xbf16>
    %c0_13 = arith.constant 0 : index
    %c0_14 = arith.constant 0 : index
    %20 = vector.load %arg6[%c0_13, %c0_14] : memref<64x128xbf16, #tpu.memory_space<vmem>>, vector<64x128xbf16>
    %cst_15 = arith.constant dense<0.000000e+00> : vector<128x128xf32>
    %21 = tpu.matmul %19, %20, %cst_15 {dimension_numbers = #tpu.dot_dimension_numbers<[1], [0], [0], [1], [0, 0, 1, 1], [], []>} : vector<128x64xbf16>, vector<64x128xbf16>, vector<128x128xf32> -> vector<128x128xf32>
    %c0_16 = arith.constant 0 : index
    %c0_17 = arith.constant 0 : index
    %22 = vector.load %arg7[%c0_16, %c0_17] : memref<1x256xf32, #tpu.memory_space<vmem>>, vector<1x128xf32>
    %c0_18 = arith.constant 0 : index
    %c128 = arith.constant 128 : index
    %23 = vector.load %arg7[%c0_18, %c128] : memref<1x256xf32, #tpu.memory_space<vmem>>, vector<1x128xf32>
    %24 = arith.subf %22, %23 : vector<1x128xf32>
    %25 = vector.broadcast %0 : f32 to vector<1x128xf32>
    %26 = arith.mulf %25, %24 : vector<1x128xf32>
    %27 = arith.addf %23, %26 : vector<1x128xf32>
    %28 = vector.broadcast %27 : vector<1x128xf32> to vector<128x128xf32>
    %29 = arith.addf %21, %28 : vector<128x128xf32>
    %c0_19 = arith.constant 0 : index
    %c0_20 = arith.constant 0 : index
    %30 = vector.load %arg8[%c0_19, %c0_20] : memref<128x128xf32, #tpu.memory_space<vmem>>, vector<128x128xf32>
    tpu.vector_store %arg8[%c0_19, %c0_20], %29 {strides = array<i32>} : memref<128x128xf32, #tpu.memory_space<vmem>>, vector<128x128xf32>,
    return
  }
  func.func @transform_0(%arg0: i32) -> (i32, i32) {
    %c0_i32 = arith.constant 0 : i32
    %c0_i32_0 = arith.constant 0 : i32
    %c0_i32_1 = arith.constant 0 : i32
    return %c0_i32, %c0_i32_0 : i32, i32
  }
  func.func @transform_1(%arg0: i32) -> (i32, i32) {
    %c0_i32 = arith.constant 0 : i32
    %c0_i32_0 = arith.constant 0 : i32
    return %arg0, %c0_i32 : i32, i32
  }
  func.func @transform_2(%arg0: i32) -> (i32, i32) {
    %c0_i32 = arith.constant 0 : i32
    %c0_i32_0 = arith.constant 0 : i32
    %c0_i32_1 = arith.constant 0 : i32
    return %c0_i32, %c0_i32_0 : i32, i32
  }
  func.func @transform_3(%arg0: i32) -> (i32, i32) {
    %c0_i32 = arith.constant 0 : i32
    %c0_i32_0 = arith.constant 0 : i32
    %c0_i32_1 = arith.constant 0 : i32
    return %c0_i32, %c0_i32_0 : i32, i32
  }
  func.func @transform_4(%arg0: i32) -> (i32, i32) {
    %c0_i32 = arith.constant 0 : i32
    %c0_i32_0 = arith.constant 0 : i32
    %c0_i32_1 = arith.constant 0 : i32
    return %c0_i32, %c0_i32_0 : i32, i32
  }
  func.func @transform_5(%arg0: i32) -> (i32, i32) {
    %c0_i32 = arith.constant 0 : i32
    %c0_i32_0 = arith.constant 0 : i32
    %c0_i32_1 = arith.constant 0 : i32
    return %c0_i32, %c0_i32_0 : i32, i32
  }
  func.func @transform_6(%arg0: i32) -> (i32, i32) {
    %c0_i32 = arith.constant 0 : i32
    %c0_i32_0 = arith.constant 0 : i32
    %c0_i32_1 = arith.constant 0 : i32
    return %c0_i32, %c0_i32_0 : i32, i32
  }
  func.func @transform_7(%arg0: i32) -> (i32, i32) {
    %c0_i32 = arith.constant 0 : i32
    %c0_i32_0 = arith.constant 0 : i32
    return %arg0, %c0_i32 : i32, i32
  }
}

</mosaic_0001>

<llo_original>
// kernel: tpu_custom_call.1
$region0: #{tpu_custom_call.1}
  #allocation0 [shape = 'u32[]', space=smem, size = 0x4, offset = 0x4, fixed_abs, tag = 'smem constant byte address 0x4 - core index']
  #allocation1 [shape = 'u32[72,128]{1,0:T(1,128)}', space=vmem, size = 0x9000, scoped, tag = 'internal scratch']
  #allocation2 [shape = 'f32[1,1]{1,0:T(1,128)S(6)}', space=smem, size = 0x200, scoped, tag = 'scoped memory for tpu_custom_call.1']
  %s0 = inlined_call_operand.<no memory space> [shape: f32[1,1], index: 0, kind: input, shape index: {}]
  %s1 = inlined_call_operand.vmem [shape: bf16[256,64], index: 1, kind: input, shape index: {}]
  %s2 = inlined_call_operand.vmem [shape: bf16[64,64], index: 2, kind: input, shape index: {}]
  %s3 = inlined_call_operand.vmem [shape: f32[1,64], index: 3, kind: input, shape index: {}]
  %s4 = inlined_call_operand.vmem [shape: f32[1,64], index: 4, kind: input, shape index: {}]
  %s5 = inlined_call_operand.vmem [shape: bf16[64,128], index: 5, kind: input, shape index: {}]
  %s6 = inlined_call_operand.vmem [shape: f32[1,256], index: 6, kind: input, shape index: {}]
  %s7 = inlined_call_operand.hbm [shape: f32[256,128], index: 7, kind: output, shape index: {}]
  %s8 = sld [smem:[#allocation0]]
  $region61: #{tpu_custom_call.1} parent=0
    _
  %s10 = ssub.s32 1, %s8
  %s11 = scalar_select 0, %s10, %s8
  %12 = sst [smem:[#allocation2]] %s0
  $region1: #{tpu_custom_call.1} parent=0
    #allocation3 [shape = 'u8[131072]{0}', space=vmem, size = 0x20000, scoped, tag = 'output window, operand 0']
    #allocation4 [shape = 's32[2]{0}', space=sflag, size = 0x8, scoped, tag = 'scoped memory for tpu_custom_call.1']
    %13 = vsyncpa [#allocation4], 0
    %s14 = scalar_lea.sflag [#allocation4], 1
    %15 = vsyncpa %s14, 0
    loop: start=0, step=1, limit=4
    $region2: #{tpu_custom_call.1} parent=1 // loop_pre_header
      _
    $region3: #{tpu_custom_call.1} parent=1 // loop_header
      %s17 = sphi 0, %s21
      %p18 = scmp.ge.s32.totalorder %s17, 4
      %s25 = sphi 0, %s25
      %s27 = sphi 0, %s25
      %s28 = sphi 0, %s27
      %s42 = sphi 0, %s28
      %s48 = sphi 0, %s50
      %s51 = sphi 0, %s48
      %s52 = sphi 0, %s51
      %s68 = sphi 0, %s52
      %s72 = sphi 0, %s72
      %s74 = sphi 0, %s72
      %s75 = sphi 0, %s74
      %s89 = sphi 0, %s75
      %s93 = sphi 0, %s93
      %s95 = sphi 0, %s93
      %s96 = sphi 0, %s95
      %s110 = sphi 0, %s96
      %s114 = sphi 0, %s114
      %s116 = sphi 0, %s114
      %s117 = sphi 0, %s116
      %s131 = sphi 0, %s117
      %s135 = sphi 0, %s135
      %s137 = sphi 0, %s135
      %s138 = sphi 0, %s137
      %s152 = sphi 0, %s138
      %s156 = sphi 0, %s156
      %s158 = sphi 0, %s156
      %s159 = sphi 0, %s158
      %s173 = sphi 0, %s159
      %s179 = sphi 0, %s181
      %s182 = sphi 0, %s179
      %s183 = sphi 0, %s182
      %s199 = sphi 0, %s183
    $region4: #{tpu_custom_call.1} parent=1 // loop_header_branch
      %20 = sbr.rel (%p18) target = $region8
    $region5: #{tpu_custom_call.1} parent=1 // loop_body
      %s22 = ssub.s32 %s17, 1
      %s23 = ssub.s32 %s17, 2
      %s24 = sadd.s32 %s17, 1
      %s26 = sadd.s32 %s25, 1
      %p29 = scmp.eq.s32.totalorder %s17, 1
      %p30 = scmp.ne.s32.totalorder %s25, %s27
      %p31 = scmp.eq.s32.totalorder %s17, 0
      %p32 = por %p30, %p31
      %p33 = scmp.ne.s32.totalorder %s25, %s27
      %p34 = scmp.eq.s32.totalorder %s22, 1
      %p35 = por %p33, %p34
      %p36 = scmp.ne.s32.totalorder %s27, %s28
      %p37 = scmp.eq.s32.totalorder %s22, 0
      %p38 = por %p36, %p37
      %p39 = scmp.ne.s32.totalorder %s27, %s28
      %p40 = scmp.eq.s32.totalorder %s23, 1
      %p41 = por %p39, %p40
      %p43 = scmp.ne.s32.totalorder %s28, %s42
      %p44 = scmp.eq.s32.totalorder %s23, 0
      %p45 = por %p43, %p44
      %s46 = ssub.s32 %s17, %s24
      %p47 = scmp.eq.s32.totalorder %s46, 0
      %s49 = sadd.s32 %s48, 1
      %s50 = scalar_select %p47, %s48, %s49
      %p53 = pneg %p47
      %p54 = scmp.eq.s32.totalorder %s17, 1
      %p55 = por %p53, %p54
      %p56 = scmp.ne.s32.totalorder %s48, %s51
      %p57 = scmp.eq.s32.totalorder %s17, 0
      %p58 = por %p56, %p57
      %p59 = scmp.ne.s32.totalorder %s48, %s51
      %p60 = scmp.eq.s32.totalorder %s22, 1
      %p61 = por %p59, %p60
      %p62 = scmp.ne.s32.totalorder %s51, %s52
      %p63 = scmp.eq.s32.totalorder %s22, 0
      %p64 = por %p62, %p63
      %p65 = scmp.ne.s32.totalorder %s51, %s52
      %p66 = scmp.eq.s32.totalorder %s23, 1
      %p67 = por %p65, %p66
      %p69 = scmp.ne.s32.totalorder %s52, %s68
      %p70 = scmp.eq.s32.totalorder %s23, 0
      %p71 = por %p69, %p70
      %s73 = sadd.s32 %s72, 1
      %p76 = scmp.eq.s32.totalorder %s17, 1
      %p77 = scmp.ne.s32.totalorder %s72, %s74
      %p78 = scmp.eq.s32.totalorder %s17, 0
      %p79 = por %p77, %p78
      %p80 = scmp.ne.s32.totalorder %s72, %s74
      %p81 = scmp.eq.s32.totalorder %s22, 1
      %p82 = por %p80, %p81
      %p83 = scmp.ne.s32.totalorder %s74, %s75
      %p84 = scmp.eq.s32.totalorder %s22, 0
      %p85 = por %p83, %p84
      %p86 = scmp.ne.s32.totalorder %s74, %s75
      %p87 = scmp.eq.s32.totalorder %s23, 1
      %p88 = por %p86, %p87
      %p90 = scmp.ne.s32.totalorder %s75, %s89
      %p91 = scmp.eq.s32.totalorder %s23, 0
      %p92 = por %p90, %p91
      %s94 = sadd.s32 %s93, 1
      %p97 = scmp.eq.s32.totalorder %s17, 1
      %p98 = scmp.ne.s32.totalorder %s93, %s95
      %p99 = scmp.eq.s32.totalorder %s17, 0
      %p100 = por %p98, %p99
      %p101 = scmp.ne.s32.totalorder %s93, %s95
      %p102 = scmp.eq.s32.totalorder %s22, 1
      %p103 = por %p101, %p102
      %p104 = scmp.ne.s32.totalorder %s95, %s96
      %p105 = scmp.eq.s32.totalorder %s22, 0
      %p106 = por %p104, %p105
      %p107 = scmp.ne.s32.totalorder %s95, %s96
      %p108 = scmp.eq.s32.totalorder %s23, 1
      %p109 = por %p107, %p108
      %p111 = scmp.ne.s32.totalorder %s96, %s110
      %p112 = scmp.eq.s32.totalorder %s23, 0
      %p113 = por %p111, %p112
      %s115 = sadd.s32 %s114, 1
      %p118 = scmp.eq.s32.totalorder %s17, 1
      %p119 = scmp.ne.s32.totalorder %s114, %s116
      %p120 = scmp.eq.s32.totalorder %s17, 0
      %p121 = por %p119, %p120
      %p122 = scmp.ne.s32.totalorder %s114, %s116
      %p123 = scmp.eq.s32.totalorder %s22, 1
      %p124 = por %p122, %p123
      %p125 = scmp.ne.s32.totalorder %s116, %s117
      %p126 = scmp.eq.s32.totalorder %s22, 0
      %p127 = por %p125, %p126
      %p128 = scmp.ne.s32.totalorder %s116, %s117
      %p129 = scmp.eq.s32.totalorder %s23, 1
      %p130 = por %p128, %p129
      %p132 = scmp.ne.s32.totalorder %s117, %s131
      %p133 = scmp.eq.s32.totalorder %s23, 0
      %p134 = por %p132, %p133
      %s136 = sadd.s32 %s135, 1
      %p139 = scmp.eq.s32.totalorder %s17, 1
      %p140 = scmp.ne.s32.totalorder %s135, %s137
      %p141 = scmp.eq.s32.totalorder %s17, 0
      %p142 = por %p140, %p141
      %p143 = scmp.ne.s32.totalorder %s135, %s137
      %p144 = scmp.eq.s32.totalorder %s22, 1
      %p145 = por %p143, %p144
      %p146 = scmp.ne.s32.totalorder %s137, %s138
      %p147 = scmp.eq.s32.totalorder %s22, 0
      %p148 = por %p146, %p147
      %p149 = scmp.ne.s32.totalorder %s137, %s138
      %p150 = scmp.eq.s32.totalorder %s23, 1
      %p151 = por %p149, %p150
      %p153 = scmp.ne.s32.totalorder %s138, %s152
      %p154 = scmp.eq.s32.totalorder %s23, 0
      %p155 = por %p153, %p154
      %s157 = sadd.s32 %s156, 1
      %p160 = scmp.eq.s32.totalorder %s17, 1
      %p161 = scmp.ne.s32.totalorder %s156, %s158
      %p162 = scmp.eq.s32.totalorder %s17, 0
      %p163 = por %p161, %p162
      %p164 = scmp.ne.s32.totalorder %s156, %s158
      %p165 = scmp.eq.s32.totalorder %s22, 1
      %p166 = por %p164, %p165
      %p167 = scmp.ne.s32.totalorder %s158, %s159
      %p168 = scmp.eq.s32.totalorder %s22, 0
      %p169 = por %p167, %p168
      %p170 = scmp.ne.s32.totalorder %s158, %s159
      %p171 = scmp.eq.s32.totalorder %s23, 1
      %p172 = por %p170, %p171
      %p174 = scmp.ne.s32.totalorder %s159, %s173
      %p175 = scmp.eq.s32.totalorder %s23, 0
      %p176 = por %p174, %p175
      %s177 = ssub.s32 %s17, %s24
      %p178 = scmp.eq.s32.totalorder %s177, 0
      %s180 = sadd.s32 %s179, 1
      %s181 = scalar_select %p178, %s179, %s180
      %p184 = pneg %p178
      %p185 = scmp.eq.s32.totalorder %s17, 1
      %p186 = por %p184, %p185
      %p187 = scmp.ne.s32.totalorder %s179, %s182
      %p188 = scmp.eq.s32.totalorder %s17, 0
      %p189 = por %p187, %p188
      %p190 = scmp.ne.s32.totalorder %s179, %s182
      %p191 = scmp.eq.s32.totalorder %s22, 1
      %p192 = por %p190, %p191
      %p193 = scmp.ne.s32.totalorder %s182, %s183
      %p194 = scmp.eq.s32.totalorder %s22, 0
      %p195 = por %p193, %p194
      %p196 = scmp.ne.s32.totalorder %s182, %s183
      %p197 = scmp.eq.s32.totalorder %s23, 1
      %p198 = por %p196, %p197
      %p200 = scmp.ne.s32.totalorder %s183, %s199
      %p201 = scmp.eq.s32.totalorder %s23, 0
      %p202 = por %p200, %p201
      %p203 = scmp.le.s32.totalorder 1, %s17
      %p204 = scmp.lt.s32.totalorder %s17, 3
      %p205 = pnand %p203, %p204
      %p206 = pneg %p205
      // Predicated region
      $region9: #{tpu_custom_call.1} parent=5 // pred_check
        _
      $region10: #{tpu_custom_call.1} parent=5 // pred_check_branch
        %208 = sbr.rel (%p205) target = $region12
      $region11: #{tpu_custom_call.1} parent=5 // pred_region
        %s209 = ssub.s32 %s17, 1
        // Predicated region
        $region13: #{tpu_custom_call.1} parent=11 // pred_check
          %p210 = pneg %p38
        $region14: #{tpu_custom_call.1} parent=11 // pred_check_branch
          %212 = sbr.rel (%p210) target = $region16
        $region15: #{tpu_custom_call.1} parent=11 // pred_region
          _
        $region16: #{tpu_custom_call.1} parent=11 // pred_fallthru
          _
        // Predicated region
        $region17: #{tpu_custom_call.1} parent=11 // pred_check
          %p213 = pneg %p85
        $region18: #{tpu_custom_call.1} parent=11 // pred_check_branch
          %215 = sbr.rel (%p213) target = $region20
        $region19: #{tpu_custom_call.1} parent=11 // pred_region
          _
        $region20: #{tpu_custom_call.1} parent=11 // pred_fallthru
          _
        // Predicated region
        $region21: #{tpu_custom_call.1} parent=11 // pred_check
          %p216 = pneg %p106
        $region22: #{tpu_custom_call.1} parent=11 // pred_check_branch
          %218 = sbr.rel (%p216) target = $region24
        $region23: #{tpu_custom_call.1} parent=11 // pred_region
          _
        $region24: #{tpu_custom_call.1} parent=11 // pred_fallthru
          _
        // Predicated region
        $region25: #{tpu_custom_call.1} parent=11 // pred_check
          %p219 = pneg %p127
        $region26: #{tpu_custom_call.1} parent=11 // pred_check_branch
          %221 = sbr.rel (%p219) target = $region28
        $region27: #{tpu_custom_call.1} parent=11 // pred_region
          _
        $region28: #{tpu_custom_call.1} parent=11 // pred_fallthru
          _
        // Predicated region
        $region29: #{tpu_custom_call.1} parent=11 // pred_check
          %p222 = pneg %p148
        $region30: #{tpu_custom_call.1} parent=11 // pred_check_branch
          %224 = sbr.rel (%p222) target = $region32
        $region31: #{tpu_custom_call.1} parent=11 // pred_region
          _
        $region32: #{tpu_custom_call.1} parent=11 // pred_fallthru
          _
        // Predicated region
        $region33: #{tpu_custom_call.1} parent=11 // pred_check
          %p225 = pneg %p169
        $region34: #{tpu_custom_call.1} parent=11 // pred_check_branch
          %227 = sbr.rel (%p225) target = $region36
        $region35: #{tpu_custom_call.1} parent=11 // pred_region
          _
        $region36: #{tpu_custom_call.1} parent=11 // pred_fallthru
          _
      $region12: #{tpu_custom_call.1} parent=5 // pred_fallthru
        _
      %p228 = scmp.lt.s32.totalorder %s17, 2
      // Predicated region
      $region37: #{tpu_custom_call.1} parent=5 // pred_check
        %p229 = pneg %p228
      $region38: #{tpu_custom_call.1} parent=5 // pred_check_branch
        %231 = sbr.rel (%p229) target = $region40
      $region39: #{tpu_custom_call.1} parent=5 // pred_region
        // Predicated region
        $region41: #{tpu_custom_call.1} parent=39 // pred_check
          %p232 = pneg %p58
        $region42: #{tpu_custom_call.1} parent=39 // pred_check_branch
          %234 = sbr.rel (%p232) target = $region44
        $region43: #{tpu_custom_call.1} parent=39 // pred_region
          %s235 = smul.u32 16, %s17
          %p236 = scmp.lt.s32.totalorder %s235, 31
          %s237 = scalar_select %p236, %s235, 31
          %s238 = smul.addr %s237, 4
          %s239 = scalar_lea.vmem %s1, %s238
          %s240 = smul.u32 16, %s17
        $region44: #{tpu_custom_call.1} parent=39 // pred_fallthru
          _
      $region40: #{tpu_custom_call.1} parent=5 // pred_fallthru
        _
      %p241 = scmp.le.s32.totalorder 1, %s17
      %p242 = scmp.lt.s32.totalorder %s17, 3
      %p243 = pnand %p241, %p242
      %p244 = pneg %p243
      // Predicated region
      $region45: #{tpu_custom_call.1} parent=5 // pred_check
        _
      $region46: #{tpu_custom_call.1} parent=5 // pred_check_branch
        %246 = sbr.rel (%p243) target = $region48
      $region47: #{tpu_custom_call.1} parent=5 // pred_region
        %s247 = ssub.s32 %s17, 1
        %p248 = pneg %p38
        %p249 = pneg %p35
        %s250 = smul.u32 16, %s22
        %p251 = scmp.lt.s32.totalorder %s250, 31
        %s252 = scalar_select %p251, %s250, 31
        %s253 = smul.addr %s252, 4
        %s254 = scalar_lea.vmem %s1, %s253
        %p255 = pneg %p64
        %p256 = pneg %p61
        %p257 = pneg %p85
        %p258 = pneg %p82
        %p259 = pneg %p106
        %p260 = pneg %p103
        %p261 = pneg %p127
        %p262 = pneg %p124
        %p263 = pneg %p148
        %p264 = pneg %p145
        %p265 = pneg %p169
        %p266 = pneg %p166
        %p267 = pneg %p195
        %p268 = pneg %p192
        %s269 = sand.u32 %s182, 1
        %s270 = scalar_lea.sflag [#allocation4], %s269
        %s271 = sand.u32 %s182, 1
        %s272 = smul.addr %s271, 128
        %s273 = scalar_lea.vmem [#allocation3], %s272
        %s274 = smul.u32 16, %s22
        %p275 = scmp.lt.s32.totalorder %s274, 31
        %s276 = scalar_select %p275, %s274, 31
        %s277 = smul.addr %s276, 4
        %s278 = scalar_lea.vmem %s1, %s277
        %s279 = smul.u32 16, %s22
        %s280 = smul.u32 16, %s22
        %s282 = sld [smem:[#allocation2]]
        %v283 = vld [vmem:[%s278] sm:$0xf]
        %v284 = vld [vmem:[%s278 + $0x4] sm:$0xf]
        %v285 = vld [vmem:[%s278 + $0x8] sm:$0xf]
        %v286 = vld [vmem:[%s278 + $0xc] sm:$0xf]
        %v287 = vld [vmem:[%s278 + $0x10] sm:$0xf]
        %v288 = vld [vmem:[%s278 + $0x14] sm:$0xf]
        %v289 = vld [vmem:[%s278 + $0x18] sm:$0xf]
        %v290 = vld [vmem:[%s278 + $0x1c] sm:$0xf]
        %v291 = vld [vmem:[%s278 + $0x20] sm:$0xf]
        %v292 = vld [vmem:[%s278 + $0x24] sm:$0xf]
        %v293 = vld [vmem:[%s278 + $0x28] sm:$0xf]
        %v294 = vld [vmem:[%s278 + $0x2c] sm:$0xf]
        %v295 = vld [vmem:[%s278 + $0x30] sm:$0xf]
        %v296 = vld [vmem:[%s278 + $0x34] sm:$0xf]
        %v297 = vld [vmem:[%s278 + $0x38] sm:$0xf]
        %v298 = vld [vmem:[%s278 + $0x3c] sm:$0xf]
        %v299 = vld [vmem:[%s2] sm:$0xf]
        %v300 = vld [vmem:[%s2 + $0x4] sm:$0xf]
        %v301 = vld [vmem:[%s2 + $0x8] sm:$0xf]
        %v302 = vld [vmem:[%s2 + $0xc] sm:$0xf]
        %v303 = vld [vmem:[%s2 + $0x10] sm:$0xf]
        %v304 = vld [vmem:[%s2 + $0x14] sm:$0xf]
        %v305 = vld [vmem:[%s2 + $0x18] sm:$0xf]
        %v306 = vld [vmem:[%s2 + $0x1c] sm:$0xf]
        %v307 = vld [vmem:[%s3] sm:$0x1]
        %v309 = vperm.slane %v307, 0
        %v327 = vunpack.c.l.b16 %v283
        %v328 = vunpack.c.l.b16 %v284
        %v329 = vunpack.c.l.b16 %v285
        %v330 = vunpack.c.l.b16 %v286
        %v331 = vunpack.c.l.b16 %v287
        %v332 = vunpack.c.l.b16 %v288
        %v333 = vunpack.c.l.b16 %v289
        %v334 = vunpack.c.l.b16 %v290
        %v335 = vunpack.c.l.b16 %v291
        %v336 = vunpack.c.l.b16 %v292
        %v337 = vunpack.c.l.b16 %v293
        %v338 = vunpack.c.l.b16 %v294
        %v339 = vunpack.c.l.b16 %v295
        %v340 = vunpack.c.l.b16 %v296
        %v341 = vunpack.c.l.b16 %v297
        %v342 = vunpack.c.l.b16 %v298
        %v343 = vpack.c.b16 %v328, %v327
        %v344 = vpack.c.b16 %v330, %v329
        %v345 = vpack.c.b16 %v332, %v331
        %v346 = vpack.c.b16 %v334, %v333
        %v347 = vpack.c.b16 %v336, %v335
        %v348 = vpack.c.b16 %v338, %v337
        %v349 = vpack.c.b16 %v340, %v339
        %v350 = vpack.c.b16 %v342, %v341
        %v359 = vunpack.c.l.b16 %v299
        %v360 = vunpack.c.l.b16 %v300
        %v361 = vunpack.c.l.b16 %v301
        %v362 = vunpack.c.l.b16 %v302
        %v363 = vunpack.c.l.b16 %v303
        %v364 = vunpack.c.l.b16 %v304
        %v365 = vunpack.c.l.b16 %v305
        %v366 = vunpack.c.l.b16 %v306
        %v367 = vpack.c.b16 %v360, %v359
        %v368 = vpack.c.b16 %v362, %v361
        %v369 = vpack.c.b16 %v364, %v363
        %v370 = vpack.c.b16 %v366, %v365
        %vm375 = vcmask 523264
        %v377 = vsel %vm375, %v343, 0
        %v380 = vsel %vm375, %v344, 0
        %v383 = vsel %vm375, %v345, 0
        %v386 = vsel %vm375, %v346, 0
        %v389 = vsel %vm375, %v347, 0
        %v392 = vsel %vm375, %v348, 0
        %v395 = vsel %vm375, %v349, 0
        %v398 = vsel %vm375, %v350, 0
        %400 = vmatpush.bf16.msra.mxu0 0
        %401 = vmatpush.bf16.msra.mxu0 0
        %402 = vmatpush.bf16.msra.mxu0 0
        %403 = vmatpush.bf16.msra.mxu0 0
        %404 = vmatpush.bf16.msra.mxu0 %v370
        %405 = vmatpush.bf16.msra.mxu0 %v369
        %406 = vmatpush.bf16.msra.mxu0 %v368
        %407 = vmatpush.bf16.msra.mxu0 %v367
        %408 = vmatmul.bf16.gmra.mxu0 %v377
        %v409 = vpop.f32.mrf.mxu0
        %v410 = vadd.f32 %v309, %v409
        %v411 = vpop.f32.mrf.mxu0
        %v412 = vadd.f32 %v309, %v411
        %413 = vmatmul.bf16.gmra.mxu0 %v380
        %v414 = vpop.f32.mrf.mxu0
        %v415 = vadd.f32 %v309, %v414
        %v416 = vpop.f32.mrf.mxu0
        %v417 = vadd.f32 %v309, %v416
        %418 = vmatmul.bf16.gmra.mxu0 %v383
        %v419 = vpop.f32.mrf.mxu0
        %v420 = vadd.f32 %v309, %v419
        %v421 = vpop.f32.mrf.mxu0
        %v422 = vadd.f32 %v309, %v421
        %423 = vmatmul.bf16.gmra.mxu0 %v386
        %v424 = vpop.f32.mrf.mxu0
        %v425 = vadd.f32 %v309, %v424
        %v426 = vpop.f32.mrf.mxu0
        %v427 = vadd.f32 %v309, %v426
        %428 = vmatmul.bf16.gmra.mxu0 %v389
        %v429 = vpop.f32.mrf.mxu0
        %v430 = vadd.f32 %v309, %v429
        %v431 = vpop.f32.mrf.mxu0
        %v432 = vadd.f32 %v309, %v431
        %433 = vmatmul.bf16.gmra.mxu0 %v392
        %v434 = vpop.f32.mrf.mxu0
        %v435 = vadd.f32 %v309, %v434
        %v436 = vpop.f32.mrf.mxu0
        %v437 = vadd.f32 %v309, %v436
        %438 = vmatmul.bf16.gmra.mxu0 %v395
        %v439 = vpop.f32.mrf.mxu0
        %v440 = vadd.f32 %v309, %v439
        %v441 = vpop.f32.mrf.mxu0
        %v442 = vadd.f32 %v309, %v441
        %443 = vmatmul.bf16.gmra.mxu0 %v398
        %v444 = vpop.f32.mrf.mxu0
        %v445 = vadd.f32 %v309, %v444
        %v446 = vpop.f32.mrf.mxu0
        %v447 = vadd.f32 %v309, %v446
        %448 = vdwg.mxu0
        %v449 = vmax.f32 %v410, 0.0
        %v450 = vmax.f32 %v412, 0.0
        %v451 = vmax.f32 %v415, 0.0
        %v452 = vmax.f32 %v417, 0.0
        %v453 = vmax.f32 %v420, 0.0
        %v454 = vmax.f32 %v422, 0.0
        %v455 = vmax.f32 %v425, 0.0
        %v456 = vmax.f32 %v427, 0.0
        %v457 = vmax.f32 %v430, 0.0
        %v458 = vmax.f32 %v432, 0.0
        %v459 = vmax.f32 %v435, 0.0
        %v460 = vmax.f32 %v437, 0.0
        %v461 = vmax.f32 %v440, 0.0
        %v462 = vmax.f32 %v442, 0.0
        %v463 = vmax.f32 %v445, 0.0
        %v464 = vmax.f32 %v447, 0.0
        %s465 = ssub.f32 1.0, %s282
        %v466 = vld [vmem:[%s4] sm:$0x1]
        %s467 = smul.f32 %s282, 2.0
        %s468 = ssub.f32 %s467, 1.0
        %v469 = vstv %s468
        %v470 = vmul.f32 %v466, %v469
        %v471 = vstv %s465
        %v472 = vadd.f32 %v471, %v470
        %v474 = vperm.slane %v472, 0
        %v476 = vmul.f32 %v449, %v474
        %v477 = vmul.f32 %v450, %v474
        %v478 = vmul.f32 %v451, %v474
        %v479 = vmul.f32 %v452, %v474
        %v480 = vmul.f32 %v453, %v474
        %v481 = vmul.f32 %v454, %v474
        %v482 = vmul.f32 %v455, %v474
        %v483 = vmul.f32 %v456, %v474
        %v484 = vmul.f32 %v457, %v474
        %v485 = vmul.f32 %v458, %v474
        %v486 = vmul.f32 %v459, %v474
        %v487 = vmul.f32 %v460, %v474
        %v488 = vmul.f32 %v461, %v474
        %v489 = vmul.f32 %v462, %v474
        %v490 = vmul.f32 %v463, %v474
        %v491 = vmul.f32 %v464, %v474
        %v492 = vpack.c.bf16 %v477, %v476
        %v493 = vpack.c.bf16 %v479, %v478
        %v494 = vpack.c.bf16 %v481, %v480
        %v495 = vpack.c.bf16 %v483, %v482
        %v496 = vpack.c.bf16 %v485, %v484
        %v497 = vpack.c.bf16 %v487, %v486
        %v498 = vpack.c.bf16 %v489, %v488
        %v499 = vpack.c.bf16 %v491, %v490
        %v500 = vld [vmem:[%s5] sm:$0xf]
        %v501 = vld [vmem:[%s5 + $0x4] sm:$0xf]
        %v502 = vld [vmem:[%s5 + $0x8] sm:$0xf]
        %v503 = vld [vmem:[%s5 + $0xc] sm:$0xf]
        %v504 = vld [vmem:[%s5 + $0x10] sm:$0xf]
        %v505 = vld [vmem:[%s5 + $0x14] sm:$0xf]
        %v506 = vld [vmem:[%s5 + $0x18] sm:$0xf]
        %v507 = vld [vmem:[%s5 + $0x1c] sm:$0xf]
        %v508 = vld [vmem:[%s6] sm:$0x1]
        %v509 = vld [vmem:[%s6 + $0x1] sm:$0x1]
        %v510 = vsub.f32 %v508, %v509
        %v511 = vstv %s282
        %v512 = vmul.f32 %v511, %v510
        %v513 = vadd.f32 %v509, %v512
        %v515 = vperm.slane %v513, 0
        %v525 = vunpack.c.l.b16 %v500
        %v526 = vunpack.c.l.b16 %v501
        %v527 = vunpack.c.l.b16 %v502
        %v528 = vunpack.c.l.b16 %v503
        %v529 = vunpack.c.l.b16 %v504
        %v530 = vunpack.c.l.b16 %v505
        %v531 = vunpack.c.l.b16 %v506
        %v532 = vunpack.c.l.b16 %v507
        %v533 = vpack.c.b16 %v526, %v525
        %v534 = vpack.c.b16 %v528, %v527
        %v535 = vpack.c.b16 %v530, %v529
        %v536 = vpack.c.b16 %v532, %v531
        %v542 = vsel %vm375, %v492, 0
        %v545 = vsel %vm375, %v493, 0
        %v548 = vsel %vm375, %v494, 0
        %v551 = vsel %vm375, %v495, 0
        %v554 = vsel %vm375, %v496, 0
        %v557 = vsel %vm375, %v497, 0
        %v560 = vsel %vm375, %v498, 0
        %v563 = vsel %vm375, %v499, 0
        %565 = vmatpush.bf16.msra.mxu0 0
        %566 = vmatpush.bf16.msra.mxu0 0
        %567 = vmatpush.bf16.msra.mxu0 0
        %568 = vmatpush.bf16.msra.mxu0 0
        %569 = vmatpush.bf16.msra.mxu0 %v536
        %570 = vmatpush.bf16.msra.mxu0 %v535
        %571 = vmatpush.bf16.msra.mxu0 %v534
        %572 = vmatpush.bf16.msra.mxu0 %v533
        %573 = vmatmul.bf16.gmra.mxu0 %v542
        %v574 = vpop.f32.mrf.mxu0
        %v575 = vadd.f32 %v515, %v574
        %v576 = vpop.f32.mrf.mxu0
        %v577 = vadd.f32 %v515, %v576
        %578 = vmatmul.bf16.gmra.mxu0 %v545
        %v579 = vpop.f32.mrf.mxu0
        %v580 = vadd.f32 %v515, %v579
        %v581 = vpop.f32.mrf.mxu0
        %v582 = vadd.f32 %v515, %v581
        %583 = vmatmul.bf16.gmra.mxu0 %v548
        %v584 = vpop.f32.mrf.mxu0
        %v585 = vadd.f32 %v515, %v584
        %v586 = vpop.f32.mrf.mxu0
        %v587 = vadd.f32 %v515, %v586
        %588 = vmatmul.bf16.gmra.mxu0 %v551
        %v589 = vpop.f32.mrf.mxu0
        %v590 = vadd.f32 %v515, %v589
        %v591 = vpop.f32.mrf.mxu0
        %v592 = vadd.f32 %v515, %v591
        %593 = vmatmul.bf16.gmra.mxu0 %v554
        %v594 = vpop.f32.mrf.mxu0
        %v595 = vadd.f32 %v515, %v594
        %v596 = vpop.f32.mrf.mxu0
        %v597 = vadd.f32 %v515, %v596
        %598 = vmatmul.bf16.gmra.mxu0 %v557
        %v599 = vpop.f32.mrf.mxu0
        %v600 = vadd.f32 %v515, %v599
        %v601 = vpop.f32.mrf.mxu0
        %v602 = vadd.f32 %v515, %v601
        %603 = vmatmul.bf16.gmra.mxu0 %v560
        %v604 = vpop.f32.mrf.mxu0
        %v605 = vadd.f32 %v515, %v604
        %v606 = vpop.f32.mrf.mxu0
        %v607 = vadd.f32 %v515, %v606
        %608 = vmatmul.bf16.gmra.mxu0 %v563
        %v609 = vpop.f32.mrf.mxu0
        %v610 = vadd.f32 %v515, %v609
        %v611 = vpop.f32.mrf.mxu0
        %v612 = vadd.f32 %v515, %v611
        %613 = vdwg.mxu0
        %614 = vst [vmem:[%s273] sm:$0xff] %v575
        %615 = vst [vmem:[%s273 + $0x8] sm:$0xff] %v577
        %616 = vst [vmem:[%s273 + $0x10] sm:$0xff] %v580
        %617 = vst [vmem:[%s273 + $0x18] sm:$0xff] %v582
        %618 = vst [vmem:[%s273 + $0x20] sm:$0xff] %v585
        %619 = vst [vmem:[%s273 + $0x28] sm:$0xff] %v587
        %620 = vst [vmem:[%s273 + $0x30] sm:$0xff] %v590
        %621 = vst [vmem:[%s273 + $0x38] sm:$0xff] %v592
        %622 = vst [vmem:[%s273 + $0x40] sm:$0xff] %v595
        %623 = vst [vmem:[%s273 + $0x48] sm:$0xff] %v597
        %624 = vst [vmem:[%s273 + $0x50] sm:$0xff] %v600
        %625 = vst [vmem:[%s273 + $0x58] sm:$0xff] %v602
        %626 = vst [vmem:[%s273 + $0x60] sm:$0xff] %v605
        %627 = vst [vmem:[%s273 + $0x68] sm:$0xff] %v607
        %628 = vst [vmem:[%s273 + $0x70] sm:$0xff] %v610
        %629 = vst [vmem:[%s273 + $0x78] sm:$0xff] %v612
        %s630 = sand.u32 %s182, 1
        %s631 = scalar_lea.sflag [#allocation4], %s630
        %s632 = sand.u32 %s182, 1
        %s633 = smul.addr %s632, 128
        %s634 = scalar_lea.vmem [#allocation3], %s633
        // Predicated region
        $region49: #{tpu_custom_call.1} parent=47 // pred_check
          %p635 = pneg %p192
        $region50: #{tpu_custom_call.1} parent=47 // pred_check_branch
          %637 = sbr.rel (%p635) target = $region52
        $region51: #{tpu_custom_call.1} parent=47 // pred_region
          %s638 = smul.u32 16, %s22
          %640 = vsyncadd %s631, 0
          %s641 = smul.addr %s638, 8
          %s642 = scalar_lea.hbm %s7, %s641
          %s643 = sshll.u32 %s634, 4
          %s644 = int_to_ptr.vmem [resolvable:$true] %s643
          %s645 = sshll.u32 %s642, 4
          %s646 = int_to_ptr.hbm [resolvable:$true] %s645
          %651 = dma.vmem_to_hbm [thread:$0]  %s644, 2048, %s646, %s631, 128, 128, 8
        $region52: #{tpu_custom_call.1} parent=47 // pred_fallthru
          _
      $region48: #{tpu_custom_call.1} parent=5 // pred_fallthru
        _
      %p652 = scmp.le.s32.totalorder 2, %s17
      // Predicated region
      $region53: #{tpu_custom_call.1} parent=5 // pred_check
        %p653 = pneg %p652
      $region54: #{tpu_custom_call.1} parent=5 // pred_check_branch
        %655 = sbr.rel (%p653) target = $region56
      $region55: #{tpu_custom_call.1} parent=5 // pred_region
        %s656 = ssub.s32 %s17, 2
        // Predicated region
        $region57: #{tpu_custom_call.1} parent=55 // pred_check
          %p657 = pneg %p198
        $region58: #{tpu_custom_call.1} parent=55 // pred_check_branch
          %659 = sbr.rel (%p657) target = $region60
        $region59: #{tpu_custom_call.1} parent=55 // pred_region
          %s660 = sand.u32 %s183, 1
          %s661 = scalar_lea.sflag [#allocation4], %s660
          %s662 = sand.u32 %s183, 1
          %s663 = smul.addr %s662, 128
          %s664 = scalar_lea.vmem [#allocation3], %s663
          %666 = dma.done %s661, 2048
        $region60: #{tpu_custom_call.1} parent=55 // pred_fallthru
          _
      $region56: #{tpu_custom_call.1} parent=5 // pred_fallthru
        _
    $region6: #{tpu_custom_call.1} parent=1 // loop_footer
      %s21 = sadd.s32 1, %s17
    $region7: #{tpu_custom_call.1} parent=1 // loop_footer_branch
      %16 = sbr.rel target = $region3
    $region8: #{tpu_custom_call.1} parent=1 // loop_exit
      _
    %667 = vsyncpa [#allocation4], 1
    %s668 = scalar_lea.sflag [#allocation4], 1
    %669 = vsyncpa %s668, 1

</llo_original>
